<compile_context>
chip_gen: v7x
topology: tpu7x:2x2x1
jax: 0.10.0
libtpu: 0.0.40
codegen_flags: <defaults>
</compile_context>

<pallas_src>
import functools

import jax
import jax.numpy as jnp
from jax.experimental import pallas as pl
from jax.experimental.pallas import tpu as pltpu


def _boundary_stats_kernel(x_ref, g_ref, stats_ref, *, H, W):
    # x_ref, g_ref : (1, D, H*W) f32 VMEM blocks for one batch element
    # stats_ref    : (1, 1, 128) f32 VMEM block; lanes 0..3 hold
    #                [inter, sum_logits, sum_targets, bce_sum]
    D = x_ref.shape[1]
    HW = H * W

    x = x_ref[0]                     # (D, HW) logits
    g = g_ref[0]                     # (D, HW) gt mask

    # Boundary masks for the padding=1 conv, from static-shape iotas.
    # h = col // W and w = col % W are recovered with exact f32 arithmetic
    # (avoids vector integer div/rem, which may not lower on the VPU).
    col = jax.lax.broadcasted_iota(jnp.int32, (D, HW), 1)
    row = jax.lax.broadcasted_iota(jnp.int32, (D, HW), 0)
    colf = col.astype(jnp.float32)
    hf = jnp.floor((colf + 0.5) * (1.0 / W))      # == h (exact for these ranges)
    wf = colf - hf * float(W)                     # == w
    w_first = wf < 0.5                            # w == 0
    w_last = wf > (float(W) - 1.5)                # w == W-1
    h_first = col < W                             # h == 0
    h_last = col >= (H - 1) * W                   # h == H-1
    d_first = row == 0
    d_last = row == (D - 1)

    zero = jnp.float32(0.0)

    # ---- separable 3x3x3 box sum with zero (padding=1) boundaries ----------
    # W pass (lane axis): neighbours at w+1 / w-1 (rolls wrap -> mask edges).
    plus_w = jnp.where(w_last, zero, pltpu.roll(g, shift=HW - 1, axis=1))
    minus_w = jnp.where(w_first, zero, pltpu.roll(g, shift=1, axis=1))
    s = g + plus_w + minus_w
    # H pass (lane axis, stride W): neighbours at h+1 / h-1.
    plus_h = jnp.where(h_last, zero, pltpu.roll(s, shift=HW - W, axis=1))
    minus_h = jnp.where(h_first, zero, pltpu.roll(s, shift=W, axis=1))
    s = s + plus_h + minus_h
    # D pass (sublane axis): neighbours at d+1 / d-1.
    plus_d = jnp.where(d_last, zero, pltpu.roll(s, shift=D - 1, axis=0))
    minus_d = jnp.where(d_first, zero, pltpu.roll(s, shift=1, axis=0))
    box = s + plus_d + minus_d

    # Laplacian conv (center weight 26, others -1) = 27*center - box_sum.
    conv = 27.0 * g - box
    # clamp(min=0) then threshold(>0.1): the clamp is redundant for the
    # threshold (negatives are already <= 0.1), so threshold directly.
    t = (conv > 0.1).astype(jnp.float32)

    # ---- dice / BCE-with-logits components (f32 accumulation) --------------
    xt = x * t
    inter = jnp.sum(xt)
    sum_x = jnp.sum(x)
    sum_t = jnp.sum(t)
    # stable form: max(x,0) - x*t + log(1 + exp(-|x|))  (exp/log stay on EUP)
    bce = jnp.maximum(x, zero) - xt + jnp.log(1.0 + jnp.exp(-jnp.abs(x)))
    bce_sum = jnp.sum(bce)

    # Lane-dense per-row stats store (lanes 0..3 carry the four scalars).
    lane = jax.lax.broadcasted_iota(jnp.int32, (1, 1, 128), 2)
    stats_ref[...] = (jnp.where(lane == 0, inter, zero)
                      + jnp.where(lane == 1, sum_x, zero)
                      + jnp.where(lane == 2, sum_t, zero)
                      + jnp.where(lane == 3, bce_sum, zero))


def boundary_loss(boundary_logits, gtmasks, weight1, weight2):
    """boundary_logits, gtmasks: (N, 1, D, H, W) float32 (NCDHW, C=1)."""
    N, C, D, H, W = boundary_logits.shape
    assert C == 1, "conv3d in the reference module has a single channel"
    # TODO(synk): F.interpolate(..., mode='nearest') branch is not implemented;
    # it is only hit when logits and gtmasks spatial shapes differ.

    # Free metadata reshapes (contiguous) -- no jnp.pad, no extra HBM traffic.
    x2 = boundary_logits.reshape(N, D, H * W).astype(jnp.float32)
    g2 = gtmasks.reshape(N, D, H * W).astype(jnp.float32)

    vol_bytes = D * H * W * 4
    # 2 double-buffered inputs + a handful of volume-sized temporaries; capped
    # to v7x's 64 MiB physical VMEM.
    # TODO(synk): add D-slab (1-plane halo) tiling for very large per-sample
    # volumes that exceed this budget.
    vmem_limit = int(min(64 * 1024 * 1024, max(32 * 1024 * 1024, 16 * vol_bytes)))

    kernel = functools.partial(_boundary_stats_kernel, H=H, W=W)
    stats = pl.pallas_call(
        kernel,
        out_shape=jax.ShapeDtypeStruct((N, 1, 128), jnp.float32),
        grid_spec=pltpu.PrefetchScalarGridSpec(
            num_scalar_prefetch=0,
            grid=(N,),
            in_specs=[
                pl.BlockSpec((1, D, H * W), lambda b: (b, 0, 0)),
                pl.BlockSpec((1, D, H * W), lambda b: (b, 0, 0)),
            ],
            # Per-row output block keeps the "parallel" batch axis race-free.
            out_specs=pl.BlockSpec((1, 1, 128), lambda b: (b, 0, 0)),
        ),
        compiler_params=pltpu.CompilerParams(
            dimension_semantics=("parallel",),
            vmem_limit_bytes=vmem_limit,
        ),
    )(x2, g2)

    inter = stats[:, 0, 0]
    sum_x = stats[:, 0, 1]
    sum_t = stats[:, 0, 2]
    bce_sum = stats[:, 0, 3]

    eps = 1.0
    dice_coeff = jnp.mean(2.0 * inter / (sum_x + sum_t + eps))   # mean over N
    dice_loss = 1.0 - dice_coeff
    bce_loss = jnp.sum(bce_sum) / float(N * D * H * W)           # mean reduction

    w1 = jnp.asarray(weight1, jnp.float32)
    w2 = jnp.asarray(weight2, jnp.float32)
    return (w1 ** -2) * bce_loss + (w2 ** -2) * dice_loss + jnp.log(1.0 + w1 * w2)


def reference_loss(boundary_logits, gtmasks, weight1, weight2):
    """Pure-JAX reference of the PyTorch forward pass (for verification)."""
    lap = jnp.full((3, 3, 3), -1.0, jnp.float32).at[1, 1, 1].set(26.0)
    lap = lap.reshape(1, 1, 3, 3, 3)
    conv = jax.lax.conv_general_dilated(
        gtmasks.astype(jnp.float32), lap,
        window_strides=(1, 1, 1),
        padding=[(1, 1), (1, 1), (1, 1)],
        dimension_numbers=("NCDHW", "OIDHW", "NCDHW"))
    conv = jnp.maximum(conv, 0.0)
    t = jnp.where(conv > 0.1, 1.0, 0.0)
    x = boundary_logits.astype(jnp.float32)

    N = x.shape[0]
    xf = x.reshape(N, -1)
    tf = t.reshape(N, -1)
    inter = jnp.sum(xf * tf, axis=1)
    union = jnp.sum(xf, axis=1) + jnp.sum(tf, axis=1) + 1.0
    dice_loss = 1.0 - jnp.mean(2.0 * inter / union)
    bce = jnp.maximum(x, 0.0) - x * t + jnp.log(1.0 + jnp.exp(-jnp.abs(x)))
    bce_loss = jnp.mean(bce)

    w1 = jnp.asarray(weight1, jnp.float32)
    w2 = jnp.asarray(weight2, jnp.float32)
    return (w1 ** -2) * bce_loss + (w2 ** -2) * dice_loss + jnp.log(1.0 + w1 * w2)


if __name__ == "__main__":
    def run_case(case_key, shape):
        k1, k2 = jax.random.split(case_key)
        logits = jax.random.normal(k1, shape, dtype=jnp.float32)
        masks = (jax.random.uniform(k2, shape) > 0.5).astype(jnp.float32)
        # nn.Parameter(torch.Tensor([1.0])) x2 -> deterministic init, shape (1,)
        w1 = jnp.ones((1,), jnp.float32)
        w2 = jnp.ones((1,), jnp.float32)
        out = jax.block_until_ready(boundary_loss(logits, masks, w1, w2))
        ref = reference_loss(logits, masks, w1, w2)
        assert jnp.allclose(out, ref, rtol=1e-4, atol=1e-4), (shape, out, ref)

    key = jax.random.PRNGKey(0)
    ka, kb = jax.random.split(key)
    run_case(ka, (2, 1, 8, 8, 8))     # module-consistent small volume
    run_case(kb, (2, 1, 8, 16, 8))    # H != W exercises boundary masks, HW = 128 lanes

    print("KERNEL_OK")
</pallas_src>

<mosaic_0001>
module attributes {stable_mosaic.version = 11 : i64} {
  func.func @_boundary_stats_kernel(%arg0: i32, %arg1: memref<1x8x64xf32, #tpu.memory_space<vmem>>, %arg2: memref<1x8x64xf32, #tpu.memory_space<vmem>>, %arg3: memref<1x1x128xf32, #tpu.memory_space<vmem>>) attributes {dimension_semantics = [#tpu.dimension_semantics<parallel>], iteration_bounds = array<i64: 2>, scalar_prefetch = 0 : i64, scratch_operands = 0 : i64, tpu.core_type = #tpu.core_type<tc>, window_params = [{transform_indices = @transform_0, window_bounds = array<i64: 1, 8, 64>}, {transform_indices = @transform_1, window_bounds = array<i64: 1, 8, 64>}, {transform_indices = @transform_2, window_bounds = array<i64: 1, 1, 128>}]} {
    %c0 = arith.constant 0 : index
    %c0_0 = arith.constant 0 : index
    %c0_1 = arith.constant 0 : index
    %0 = vector.load %arg1[%c0, %c0_0, %c0_1] : memref<1x8x64xf32, #tpu.memory_space<vmem>>, vector<1x8x64xf32>
    %1 = vector.shape_cast %0 : vector<1x8x64xf32> to vector<8x64xf32>
    %c0_2 = arith.constant 0 : index
    %c0_3 = arith.constant 0 : index
    %c0_4 = arith.constant 0 : index
    %2 = vector.load %arg2[%c0_2, %c0_3, %c0_4] : memref<1x8x64xf32, #tpu.memory_space<vmem>>, vector<1x8x64xf32>
    %3 = vector.shape_cast %2 : vector<1x8x64xf32> to vector<8x64xf32>
    %4 = tpu.iota {dimensions = array<i32: 1>} : vector<8x64xi32>
    %5 = tpu.iota {dimensions = array<i32: 0>} : vector<8x64xi32>
    %6 = arith.sitofp %4 : vector<8x64xi32> to vector<8x64xf32>
    %cst = arith.constant 5.000000e-01 : f32
    %7 = vector.broadcast %cst : f32 to vector<8x64xf32>
    %8 = arith.addf %6, %7 : vector<8x64xf32>
    %cst_5 = arith.constant 1.250000e-01 : f32
    %9 = vector.broadcast %cst_5 : f32 to vector<8x64xf32>
    %10 = arith.mulf %8, %9 : vector<8x64xf32>
    %11 = math.floor %10 : vector<8x64xf32>
    %cst_6 = arith.constant 8.000000e+00 : f32
    %12 = vector.broadcast %cst_6 : f32 to vector<8x64xf32>
    %13 = arith.mulf %11, %12 : vector<8x64xf32>
    %14 = arith.subf %6, %13 : vector<8x64xf32>
    %cst_7 = arith.constant 5.000000e-01 : f32
    %15 = vector.broadcast %cst_7 : f32 to vector<8x64xf32>
    %16 = arith.cmpf olt, %14, %15 : vector<8x64xf32>
    %cst_8 = arith.constant 6.500000e+00 : f32
    %17 = vector.broadcast %cst_8 : f32 to vector<8x64xf32>
    %18 = arith.cmpf ogt, %14, %17 : vector<8x64xf32>
    %c8_i32 = arith.constant 8 : i32
    %19 = vector.broadcast %c8_i32 : i32 to vector<8x64xi32>
    %20 = arith.cmpi slt, %4, %19 : vector<8x64xi32>
    %c56_i32 = arith.constant 56 : i32
    %21 = vector.broadcast %c56_i32 : i32 to vector<8x64xi32>
    %22 = arith.cmpi sge, %4, %21 : vector<8x64xi32>
    %c0_i32 = arith.constant 0 : i32
    %23 = vector.broadcast %c0_i32 : i32 to vector<8x64xi32>
    %24 = arith.cmpi eq, %5, %23 : vector<8x64xi32>
    %c7_i32 = arith.constant 7 : i32
    %25 = vector.broadcast %c7_i32 : i32 to vector<8x64xi32>
    %26 = arith.cmpi eq, %5, %25 : vector<8x64xi32>
    %c63_i32 = arith.constant 63 : i32
    %27 = tpu.dynamic_rotate %3 by %c63_i32 dim 1 : vector<8x64xf32>, i32 -> vector<8x64xf32>
    %cst_9 = arith.constant 0.000000e+00 : f32
    %28 = vector.broadcast %cst_9 : f32 to vector<8x64xf32>
    %29 = arith.select %18, %28, %27 : vector<8x64xi1>, vector<8x64xf32>
    %c1_i32 = arith.constant 1 : i32
    %30 = tpu.dynamic_rotate %3 by %c1_i32 dim 1 : vector<8x64xf32>, i32 -> vector<8x64xf32>
    %cst_10 = arith.constant 0.000000e+00 : f32
    %31 = vector.broadcast %cst_10 : f32 to vector<8x64xf32>
    %32 = arith.select %16, %31, %30 : vector<8x64xi1>, vector<8x64xf32>
    %33 = arith.addf %3, %29 : vector<8x64xf32>
    %34 = arith.addf %33, %32 : vector<8x64xf32>
    %c56_i32_11 = arith.constant 56 : i32
    %35 = tpu.dynamic_rotate %34 by %c56_i32_11 dim 1 : vector<8x64xf32>, i32 -> vector<8x64xf32>
    %cst_12 = arith.constant 0.000000e+00 : f32
    %36 = vector.broadcast %cst_12 : f32 to vector<8x64xf32>
    %37 = arith.select %22, %36, %35 : vector<8x64xi1>, vector<8x64xf32>
    %c8_i32_13 = arith.constant 8 : i32
    %38 = tpu.dynamic_rotate %34 by %c8_i32_13 dim 1 : vector<8x64xf32>, i32 -> vector<8x64xf32>
    %cst_14 = arith.constant 0.000000e+00 : f32
    %39 = vector.broadcast %cst_14 : f32 to vector<8x64xf32>
    %40 = arith.select %20, %39, %38 : vector<8x64xi1>, vector<8x64xf32>
    %41 = arith.addf %34, %37 : vector<8x64xf32>
    %42 = arith.addf %41, %40 : vector<8x64xf32>
    %c7_i32_15 = arith.constant 7 : i32
    %43 = tpu.dynamic_rotate %42 by %c7_i32_15 dim 0 : vector<8x64xf32>, i32 -> vector<8x64xf32>
    %cst_16 = arith.constant 0.000000e+00 : f32
    %44 = vector.broadcast %cst_16 : f32 to vector<8x64xf32>
    %45 = arith.select %26, %44, %43 : vector<8x64xi1>, vector<8x64xf32>
    %c1_i32_17 = arith.constant 1 : i32
    %46 = tpu.dynamic_rotate %42 by %c1_i32_17 dim 0 : vector<8x64xf32>, i32 -> vector<8x64xf32>
    %cst_18 = arith.constant 0.000000e+00 : f32
    %47 = vector.broadcast %cst_18 : f32 to vector<8x64xf32>
    %48 = arith.select %24, %47, %46 : vector<8x64xi1>, vector<8x64xf32>
    %49 = arith.addf %42, %45 : vector<8x64xf32>
    %50 = arith.addf %49, %48 : vector<8x64xf32>
    %cst_19 = arith.constant 2.700000e+01 : f32
    %51 = vector.broadcast %cst_19 : f32 to vector<8x64xf32>
    %52 = arith.mulf %51, %3 : vector<8x64xf32>
    %53 = arith.subf %52, %50 : vector<8x64xf32>
    %cst_20 = arith.constant 1.000000e-01 : f32
    %54 = vector.broadcast %cst_20 : f32 to vector<8x64xf32>
    %55 = arith.cmpf ogt, %53, %54 : vector<8x64xf32>
    %56 = arith.extui %55 : vector<8x64xi1> to vector<8x64xi32>
    %57 = arith.sitofp %56 : vector<8x64xi32> to vector<8x64xf32>
    %58 = arith.mulf %1, %57 : vector<8x64xf32>
    %59 = vector.shape_cast %58 : vector<8x64xf32> to vector<1x8x64xf32>
    %cst_21 = arith.constant dense<0.000000e+00> : vector<1xf32>
    %60 = vector.multi_reduction <add>, %59, %cst_21 [1, 2] : vector<1x8x64xf32> to vector<1xf32>
    %61 = vector.shape_cast %60 : vector<1xf32> to vector<1x1x1xf32>
    %62 = vector.extract %61[0, 0, 0] : f32 from vector<1x1x1xf32>
    %63 = vector.shape_cast %1 : vector<8x64xf32> to vector<1x8x64xf32>
    %cst_22 = arith.constant dense<0.000000e+00> : vector<1xf32>
    %64 = vector.multi_reduction <add>, %63, %cst_22 [1, 2] : vector<1x8x64xf32> to vector<1xf32>
    %65 = vector.shape_cast %64 : vector<1xf32> to vector<1x1x1xf32>
    %66 = vector.extract %65[0, 0, 0] : f32 from vector<1x1x1xf32>
    %67 = vector.shape_cast %57 : vector<8x64xf32> to vector<1x8x64xf32>
    %cst_23 = arith.constant dense<0.000000e+00> : vector<1xf32>
    %68 = vector.multi_reduction <add>, %67, %cst_23 [1, 2] : vector<1x8x64xf32> to vector<1xf32>
    %69 = vector.shape_cast %68 : vector<1xf32> to vector<1x1x1xf32>
    %70 = vector.extract %69[0, 0, 0] : f32 from vector<1x1x1xf32>
    %cst_24 = arith.constant 0.000000e+00 : f32
    %71 = vector.broadcast %cst_24 : f32 to vector<8x64xf32>
    %72 = arith.maximumf %1, %71 : vector<8x64xf32>
    %73 = arith.subf %72, %58 : vector<8x64xf32>
    %74 = math.absf %1 : vector<8x64xf32>
    %cst_25 = arith.constant 0.000000e+00 : f32
    %75 = vector.broadcast %cst_25 : f32 to vector<8x64xf32>
    %76 = arith.subf %75, %74 : vector<8x64xf32>
    %77 = math.exp %76 : vector<8x64xf32>
    %cst_26 = arith.constant 1.000000e+00 : f32
    %78 = vector.broadcast %cst_26 : f32 to vector<8x64xf32>
    %79 = arith.addf %78, %77 : vector<8x64xf32>
    %80 = math.log %79 : vector<8x64xf32>
    %81 = arith.addf %73, %80 : vector<8x64xf32>
    %82 = vector.shape_cast %81 : vector<8x64xf32> to vector<1x8x64xf32>
    %cst_27 = arith.constant dense<0.000000e+00> : vector<1xf32>
    %83 = vector.multi_reduction <add>, %82, %cst_27 [1, 2] : vector<1x8x64xf32> to vector<1xf32>
    %84 = vector.shape_cast %83 : vector<1xf32> to vector<1x1x1xf32>
    %85 = vector.extract %84[0, 0, 0] : f32 from vector<1x1x1xf32>
    %86 = tpu.iota {dimensions = array<i32: 2>} : vector<1x1x128xi32>
    %c0_i32_28 = arith.constant 0 : i32
    %87 = vector.broadcast %c0_i32_28 : i32 to vector<1x1x128xi32>
    %88 = arith.cmpi eq, %86, %87 : vector<1x1x128xi32>
    %cst_29 = arith.constant 0.000000e+00 : f32
    %89 = vector.broadcast %62 : f32 to vector<1x1x128xf32>
    %90 = vector.broadcast %cst_29 : f32 to vector<1x1x128xf32>
    %91 = arith.select %88, %89, %90 : vector<1x1x128xi1>, vector<1x1x128xf32>
    %c1_i32_30 = arith.constant 1 : i32
    %92 = vector.broadcast %c1_i32_30 : i32 to vector<1x1x128xi32>
    %93 = arith.cmpi eq, %86, %92 : vector<1x1x128xi32>
    %cst_31 = arith.constant 0.000000e+00 : f32
    %94 = vector.broadcast %66 : f32 to vector<1x1x128xf32>
    %95 = vector.broadcast %cst_31 : f32 to vector<1x1x128xf32>
    %96 = arith.select %93, %94, %95 : vector<1x1x128xi1>, vector<1x1x128xf32>
    %97 = arith.addf %91, %96 : vector<1x1x128xf32>
    %c2_i32 = arith.constant 2 : i32
    %98 = vector.broadcast %c2_i32 : i32 to vector<1x1x128xi32>
    %99 = arith.cmpi eq, %86, %98 : vector<1x1x128xi32>
    %cst_32 = arith.constant 0.000000e+00 : f32
    %100 = vector.broadcast %70 : f32 to vector<1x1x128xf32>
    %101 = vector.broadcast %cst_32 : f32 to vector<1x1x128xf32>
    %102 = arith.select %99, %100, %101 : vector<1x1x128xi1>, vector<1x1x128xf32>
    %103 = arith.addf %97, %102 : vector<1x1x128xf32>
    %c3_i32 = arith.constant 3 : i32
    %104 = vector.broadcast %c3_i32 : i32 to vector<1x1x128xi32>
    %105 = arith.cmpi eq, %86, %104 : vector<1x1x128xi32>
    %cst_33 = arith.constant 0.000000e+00 : f32
    %106 = vector.broadcast %85 : f32 to vector<1x1x128xf32>
    %107 = vector.broadcast %cst_33 : f32 to vector<1x1x128xf32>
    %108 = arith.select %105, %106, %107 : vector<1x1x128xi1>, vector<1x1x128xf32>
    %109 = arith.addf %103, %108 : vector<1x1x128xf32>
    %c0_34 = arith.constant 0 : index
    %c0_35 = arith.constant 0 : index
    %c0_36 = arith.constant 0 : index
    %110 = vector.load %arg3[%c0_34, %c0_35, %c0_36] : memref<1x1x128xf32, #tpu.memory_space<vmem>>, vector<1x1x128xf32>
    tpu.vector_store %arg3[%c0_34, %c0_35, %c0_36], %109 {strides = array<i32>} : memref<1x1x128xf32, #tpu.memory_space<vmem>>, vector<1x1x128xf32>,
    return
  }
  func.func @transform_0(%arg0: i32) -> (i32, i32, i32) {
    %c0_i32 = arith.constant 0 : i32
    %c0_i32_0 = arith.constant 0 : i32
    %c0_i32_1 = arith.constant 0 : i32
    return %arg0, %c0_i32, %c0_i32_0 : i32, i32, i32
  }
  func.func @transform_1(%arg0: i32) -> (i32, i32, i32) {
    %c0_i32 = arith.constant 0 : i32
    %c0_i32_0 = arith.constant 0 : i32
    %c0_i32_1 = arith.constant 0 : i32
    return %arg0, %c0_i32, %c0_i32_0 : i32, i32, i32
  }
  func.func @transform_2(%arg0: i32) -> (i32, i32, i32) {
    %c0_i32 = arith.constant 0 : i32
    %c0_i32_0 = arith.constant 0 : i32
    %c0_i32_1 = arith.constant 0 : i32
    return %arg0, %c0_i32, %c0_i32_0 : i32, i32, i32
  }
}

</mosaic_0001>

<llo_original>
// kernel: tpu_custom_call.1
$region0: #{tpu_custom_call.1}
  #allocation0 [shape = 'u32[]', space=smem, size = 0x4, offset = 0x4, fixed_abs, tag = 'smem constant byte address 0x4 - core index']
  #allocation1 [shape = 'u32[144,128]{1,0:T(1,128)}', space=vmem, size = 0x12000, scoped, tag = 'internal scratch']
  %s0 = inlined_call_operand.hbm [shape: f32[2,8,64], index: 0, kind: input, shape index: {}]
  %s1 = inlined_call_operand.hbm [shape: f32[2,8,64], index: 1, kind: input, shape index: {}]
  %s2 = inlined_call_operand.hbm [shape: f32[2,1,128], index: 2, kind: output, shape index: {}]
  %s3 = sld [smem:[#allocation0]]
  $region49: #{tpu_custom_call.1} parent=0
    _
  %s5 = ssub.s32 1, %s3
  %s6 = scalar_select 0, %s5, %s3
  $region1: #{tpu_custom_call.1} parent=0
    #allocation2 [shape = 'u8[8192]{0}', space=vmem, size = 0x2000, scoped, tag = 'input window, operand 0']
    #allocation3 [shape = 's32[2]{0}', space=sflag, size = 0x8, scoped, tag = 'scoped memory for tpu_custom_call.1']
    #allocation4 [shape = 's32[2]{0}', space=sflag, size = 0x8, scoped, tag = 'scoped memory for tpu_custom_call.1']
    #allocation5 [shape = 'u8[8192]{0}', space=vmem, size = 0x2000, scoped, tag = 'input window, operand 1']
    #allocation6 [shape = 's32[2]{0}', space=sflag, size = 0x8, scoped, tag = 'scoped memory for tpu_custom_call.1']
    #allocation7 [shape = 'u8[1024]{0}', space=vmem, size = 0x400, scoped, tag = 'output window, operand 0']
    %7 = vsyncpa [#allocation3], 0
    %s8 = scalar_lea.sflag [#allocation3], 1
    %9 = vsyncpa %s8, 0
    %10 = vsyncpa [#allocation6], 0
    %s11 = scalar_lea.sflag [#allocation6], 1
    %12 = vsyncpa %s11, 0
    %13 = vsyncpa [#allocation4], 0
    %s14 = scalar_lea.sflag [#allocation4], 1
    %15 = vsyncpa %s14, 0
    loop: start=0, step=1, limit=4
    $region2: #{tpu_custom_call.1} parent=1 // loop_pre_header
      _
    $region3: #{tpu_custom_call.1} parent=1 // loop_header
      %s17 = sphi 0, %s21
      %p18 = scmp.ge.s32.totalorder %s17, 4
      %s27 = sphi 0, %s29
      %s30 = sphi 0, %s27
      %s31 = sphi 0, %s30
      %s47 = sphi 0, %s31
      %s53 = sphi 0, %s55
      %s56 = sphi 0, %s53
      %s57 = sphi 0, %s56
      %s73 = sphi 0, %s57
      %s79 = sphi 0, %s81
      %s82 = sphi 0, %s79
      %s83 = sphi 0, %s82
      %s99 = sphi 0, %s83
    $region4: #{tpu_custom_call.1} parent=1 // loop_header_branch
      %20 = sbr.rel (%p18) target = $region8
    $region5: #{tpu_custom_call.1} parent=1 // loop_body
      %s22 = ssub.s32 %s17, 1
      %s23 = ssub.s32 %s17, 2
      %s24 = sadd.s32 %s17, 1
      %s25 = ssub.s32 %s17, %s24
      %p26 = scmp.eq.s32.totalorder %s25, 0
      %s28 = sadd.s32 %s27, 1
      %s29 = scalar_select %p26, %s27, %s28
      %p32 = pneg %p26
      %p33 = scmp.eq.s32.totalorder %s17, 1
      %p34 = por %p32, %p33
      %p35 = scmp.ne.s32.totalorder %s27, %s30
      %p36 = scmp.eq.s32.totalorder %s17, 0
      %p37 = por %p35, %p36
      %p38 = scmp.ne.s32.totalorder %s27, %s30
      %p39 = scmp.eq.s32.totalorder %s22, 1
      %p40 = por %p38, %p39
      %p41 = scmp.ne.s32.totalorder %s30, %s31
      %p42 = scmp.eq.s32.totalorder %s22, 0
      %p43 = por %p41, %p42
      %p44 = scmp.ne.s32.totalorder %s30, %s31
      %p45 = scmp.eq.s32.totalorder %s23, 1
      %p46 = por %p44, %p45
      %p48 = scmp.ne.s32.totalorder %s31, %s47
      %p49 = scmp.eq.s32.totalorder %s23, 0
      %p50 = por %p48, %p49
      %s51 = ssub.s32 %s17, %s24
      %p52 = scmp.eq.s32.totalorder %s51, 0
      %s54 = sadd.s32 %s53, 1
      %s55 = scalar_select %p52, %s53, %s54
      %p58 = pneg %p52
      %p59 = scmp.eq.s32.totalorder %s17, 1
      %p60 = por %p58, %p59
      %p61 = scmp.ne.s32.totalorder %s53, %s56
      %p62 = scmp.eq.s32.totalorder %s17, 0
      %p63 = por %p61, %p62
      %p64 = scmp.ne.s32.totalorder %s53, %s56
      %p65 = scmp.eq.s32.totalorder %s22, 1
      %p66 = por %p64, %p65
      %p67 = scmp.ne.s32.totalorder %s56, %s57
      %p68 = scmp.eq.s32.totalorder %s22, 0
      %p69 = por %p67, %p68
      %p70 = scmp.ne.s32.totalorder %s56, %s57
      %p71 = scmp.eq.s32.totalorder %s23, 1
      %p72 = por %p70, %p71
      %p74 = scmp.ne.s32.totalorder %s57, %s73
      %p75 = scmp.eq.s32.totalorder %s23, 0
      %p76 = por %p74, %p75
      %s77 = ssub.s32 %s17, %s24
      %p78 = scmp.eq.s32.totalorder %s77, 0
      %s80 = sadd.s32 %s79, 1
      %s81 = scalar_select %p78, %s79, %s80
      %p84 = pneg %p78
      %p85 = scmp.eq.s32.totalorder %s17, 1
      %p86 = por %p84, %p85
      %p87 = scmp.ne.s32.totalorder %s79, %s82
      %p88 = scmp.eq.s32.totalorder %s17, 0
      %p89 = por %p87, %p88
      %p90 = scmp.ne.s32.totalorder %s79, %s82
      %p91 = scmp.eq.s32.totalorder %s22, 1
      %p92 = por %p90, %p91
      %p93 = scmp.ne.s32.totalorder %s82, %s83
      %p94 = scmp.eq.s32.totalorder %s22, 0
      %p95 = por %p93, %p94
      %p96 = scmp.ne.s32.totalorder %s82, %s83
      %p97 = scmp.eq.s32.totalorder %s23, 1
      %p98 = por %p96, %p97
      %p100 = scmp.ne.s32.totalorder %s83, %s99
      %p101 = scmp.eq.s32.totalorder %s23, 0
      %p102 = por %p100, %p101
      %p103 = scmp.le.s32.totalorder 1, %s17
      %p104 = scmp.lt.s32.totalorder %s17, 3
      %p105 = pnand %p103, %p104
      %p106 = pneg %p105
      // Predicated region
      $region9: #{tpu_custom_call.1} parent=5 // pred_check
        _
      $region10: #{tpu_custom_call.1} parent=5 // pred_check_branch
        %108 = sbr.rel (%p105) target = $region12
      $region11: #{tpu_custom_call.1} parent=5 // pred_region
        %s109 = ssub.s32 %s17, 1
      $region12: #{tpu_custom_call.1} parent=5 // pred_fallthru
        _
      %p110 = scmp.lt.s32.totalorder %s17, 2
      // Predicated region
      $region13: #{tpu_custom_call.1} parent=5 // pred_check
        %p111 = pneg %p110
      $region14: #{tpu_custom_call.1} parent=5 // pred_check_branch
        %113 = sbr.rel (%p111) target = $region16
      $region15: #{tpu_custom_call.1} parent=5 // pred_region
        // Predicated region
        $region17: #{tpu_custom_call.1} parent=15 // pred_check
          %p114 = pneg %p37
        $region18: #{tpu_custom_call.1} parent=15 // pred_check_branch
          %116 = sbr.rel (%p114) target = $region20
        $region19: #{tpu_custom_call.1} parent=15 // pred_region
          %s117 = sand.u32 %s27, 1
          %s118 = scalar_lea.sflag [#allocation3], %s117
          %s119 = sand.u32 %s27, 1
          %s120 = smul.addr %s119, 8
          %s121 = scalar_lea.vmem [#allocation2], %s120
          %s123 = ssub.s32 128, 128
          %124 = vsyncadd %s118, %s123
          %s125 = smul.addr %s17, 128
          %s126 = scalar_lea.hbm %s0, %s125
          %s128 = sshll.u32 %s121, 4
          %s129 = int_to_ptr.vmem [resolvable:$true] %s128
          %131 = dma.hbm_to_vmem [thread:$0]  %s126, 128, %s129, %s118
        $region20: #{tpu_custom_call.1} parent=15 // pred_fallthru
          _
        // Predicated region
        $region21: #{tpu_custom_call.1} parent=15 // pred_check
          %p132 = pneg %p63
        $region22: #{tpu_custom_call.1} parent=15 // pred_check_branch
          %134 = sbr.rel (%p132) target = $region24
        $region23: #{tpu_custom_call.1} parent=15 // pred_region
          %s135 = sand.u32 %s53, 1
          %s136 = scalar_lea.sflag [#allocation6], %s135
          %s137 = sand.u32 %s53, 1
          %s138 = smul.addr %s137, 8
          %s139 = scalar_lea.vmem [#allocation5], %s138
          %s141 = ssub.s32 128, 128
          %142 = vsyncadd %s136, %s141
          %s143 = smul.addr %s17, 128
          %s144 = scalar_lea.hbm %s1, %s143
          %s146 = sshll.u32 %s139, 4
          %s147 = int_to_ptr.vmem [resolvable:$true] %s146
          %149 = dma.hbm_to_vmem [thread:$0]  %s144, 128, %s147, %s136
        $region24: #{tpu_custom_call.1} parent=15 // pred_fallthru
          _
      $region16: #{tpu_custom_call.1} parent=5 // pred_fallthru
        _
      %p150 = scmp.le.s32.totalorder 1, %s17
      %p151 = scmp.lt.s32.totalorder %s17, 3
      %p152 = pnand %p150, %p151
      %p153 = pneg %p152
      // Predicated region
      $region25: #{tpu_custom_call.1} parent=5 // pred_check
        _
      $region26: #{tpu_custom_call.1} parent=5 // pred_check_branch
        %155 = sbr.rel (%p152) target = $region28
      $region27: #{tpu_custom_call.1} parent=5 // pred_region
        %s156 = ssub.s32 %s17, 1
        %s157 = sand.u32 %s30, 1
        %s158 = scalar_lea.sflag [#allocation3], %s157
        %s159 = sand.u32 %s30, 1
        %s160 = smul.addr %s159, 8
        %s161 = scalar_lea.vmem [#allocation2], %s160
        // Predicated region
        $region29: #{tpu_custom_call.1} parent=27 // pred_check
          %p162 = pneg %p43
        $region30: #{tpu_custom_call.1} parent=27 // pred_check_branch
          %164 = sbr.rel (%p162) target = $region32
        $region31: #{tpu_custom_call.1} parent=27 // pred_region
          %165 = dma.done %s158, 128
        $region32: #{tpu_custom_call.1} parent=27 // pred_fallthru
          _
        %s166 = sand.u32 %s56, 1
        %s167 = scalar_lea.sflag [#allocation6], %s166
        %s168 = sand.u32 %s56, 1
        %s169 = smul.addr %s168, 8
        %s170 = scalar_lea.vmem [#allocation5], %s169
        // Predicated region
        $region33: #{tpu_custom_call.1} parent=27 // pred_check
          %p171 = pneg %p69
        $region34: #{tpu_custom_call.1} parent=27 // pred_check_branch
          %173 = sbr.rel (%p171) target = $region36
        $region35: #{tpu_custom_call.1} parent=27 // pred_region
          %174 = dma.done %s167, 128
        $region36: #{tpu_custom_call.1} parent=27 // pred_fallthru
          _
        %s175 = sand.u32 %s30, 1
        %s176 = scalar_lea.sflag [#allocation3], %s175
        %s177 = sand.u32 %s30, 1
        %s178 = smul.addr %s177, 8
        %s179 = scalar_lea.vmem [#allocation2], %s178
        %p180 = pneg %p43
        %p181 = pneg %p40
        %s182 = sand.u32 %s56, 1
        %s183 = scalar_lea.sflag [#allocation6], %s182
        %s184 = sand.u32 %s56, 1
        %s185 = smul.addr %s184, 8
        %s186 = scalar_lea.vmem [#allocation5], %s185
        %p187 = pneg %p69
        %p188 = pneg %p66
        %p189 = pneg %p95
        %p190 = pneg %p92
        %s191 = sand.u32 %s82, 1
        %s192 = scalar_lea.sflag [#allocation4], %s191
        %s193 = sand.u32 %s82, 1
        %s194 = scalar_lea.vmem [#allocation7], %s193
        %v195 = vld [vmem:[%s161] sm:$0xff]
        %v196 = vld [vmem:[%s170] sm:$0xff]
        %v197 = vlaneseq
        %v198 = vand.u32 %v197, 127
        %v199 = vlaneseq
        %v200 = vshrl.u32 %v199, 7
        %v201 = vcvt.s32.f32 %v198
        %v202 = vadd.f32 %v201, 0.5
        %v203 = vmul.f32 %v202, 0.125
        %v204 = vfloor.f32 %v203
        %v205 = vmul.f32 %v204, 8.0
        %v206 = vsub.f32 %v201, %v205
        %vm207 = vcmp.lt.f32.partialorder %v206, 0.5
        %vm208 = vcmp.gt.f32.partialorder %v206, 6.5
        %vm209 = vcmp.lt.s32.totalorder %v198, 8
        %vm210 = vcmp.ge.s32.totalorder %v198, 56
        %vm211 = vcmp.eq.s32.totalorder %v200, 0
        %vm212 = vcmp.eq.s32.totalorder %v200, 7
        %vm213 = vcmask 1048064
        %214 = vrot.lane.b32.xlu0 %v196, 64
        %v215 = vpop.permute.xlu0 %214
        %v216 = vsel %vm213, %v215, %v196
        %217 = vrot.lane.b32.xlu0 %v216, 64
        %v218 = vpop.permute.xlu0 %217
        %v219 = vsel %vm213, %v218, %v196
        %221 = vrot.lane.b32.xlu0 %v219, 127
        %v222 = vpop.permute.xlu0 %221
        %v224 = vsel %vm208, 0.0, %v222
        %225 = vrot.lane.b32.xlu0 %v219, 65
        %v226 = vpop.permute.xlu0 %225
        %v228 = vsel %vm207, 0.0, %v226
        %v229 = vadd.f32 %v196, %v224
        %v230 = vadd.f32 %v229, %v228
        %231 = vrot.lane.b32.xlu0 %v230, 64
        %v232 = vpop.permute.xlu0 %231
        %v233 = vsel %vm213, %v232, %v230
        %234 = vrot.lane.b32.xlu0 %v233, 64
        %v235 = vpop.permute.xlu0 %234
        %v236 = vsel %vm213, %v235, %v230
        %238 = vrot.lane.b32.xlu0 %v236, 120
        %v239 = vpop.permute.xlu0 %238
        %v241 = vsel %vm210, 0.0, %v239
        %242 = vrot.lane.b32.xlu0 %v236, 72
        %v243 = vpop.permute.xlu0 %242
        %v245 = vsel %vm209, 0.0, %v243
        %v246 = vadd.f32 %v230, %v241
        %v247 = vadd.f32 %v246, %v245
        %v248 = vrot.slane %v247, 1
        %v249 = vsel %vm212, 0.0, %v248
        %v250 = vrot.slane %v247, 7
        %v251 = vsel %vm211, 0.0, %v250
        %v252 = vadd.f32 %v247, %v249
        %v253 = vadd.f32 %v252, %v251
        %v254 = vmul.f32 %v196, 27.0
        %v255 = vsub.f32 %v254, %v253
        %vm256 = vcmp.gt.f32.partialorder %v255, 0.1
        %v257 = vsel %vm256, 1, 0
        %v258 = vcvt.s32.f32 %v257
        %v259 = vmul.f32 %v195, %v258
        %vm260 = vcmask 523264
        %v261 = vsel %vm260, %v259, 0.0
        %262 = vadd.xlane.f32.xlu0 %v261
        %v263 = vpop.xlane.xlu0 %262
        %v264 = vrot.slane %v263, 4
        %v265 = vadd.f32 %v263, %v264
        %v266 = vrot.slane %v265, 2
        %v267 = vadd.f32 %v265, %v266
        %v268 = vrot.slane %v267, 1
        %v269 = vadd.f32 %v267, %v268
        %s270 = vtos %v269
        %v271 = vsel %vm260, %v195, 0.0
        %272 = vadd.xlane.f32.xlu0 %v271
        %v273 = vpop.xlane.xlu0 %272
        %v274 = vrot.slane %v273, 4
        %v275 = vadd.f32 %v273, %v274
        %v276 = vrot.slane %v275, 2
        %v277 = vadd.f32 %v275, %v276
        %v278 = vrot.slane %v277, 1
        %v279 = vadd.f32 %v277, %v278
        %s280 = vtos %v279
        %v281 = vsel %vm260, %v258, 0.0
        %282 = vadd.xlane.f32.xlu0 %v281
        %v283 = vpop.xlane.xlu0 %282
        %v284 = vrot.slane %v283, 4
        %v285 = vadd.f32 %v283, %v284
        %v286 = vrot.slane %v285, 2
        %v287 = vadd.f32 %v285, %v286
        %v288 = vrot.slane %v287, 1
        %v289 = vadd.f32 %v287, %v288
        %s290 = vtos %v289
        %v291 = vmax.f32 %v195, 0.0
        %v292 = vsub.f32 %v291, %v259
        %v293 = vand.u32 2147483647, %v195
        %v294 = vsub.f32 0.0, %v293
        %v295 = vmul.f32 %v294, 1.442695
        %v296 = vpow.pop %v295
        %v297 = vadd.f32 %v296, 1.0
        %v298 = vlog2.pop %v297
        %v299 = vmul.f32 %v298, 0.6931472
        %v300 = vadd.f32 %v292, %v299
        %v301 = vsel %vm260, %v300, 0.0
        %302 = vadd.xlane.f32.xlu0 %v301
        %v303 = vpop.xlane.xlu0 %302
        %v304 = vrot.slane %v303, 4
        %v305 = vadd.f32 %v303, %v304
        %v306 = vrot.slane %v305, 2
        %v307 = vadd.f32 %v305, %v306
        %v308 = vrot.slane %v307, 1
        %v309 = vadd.f32 %v307, %v308
        %s310 = vtos %v309
        %vm311 = vcmp.eq.s32.totalorder %v198, 0
        %v312 = vstv %s270
        %v313 = vsel %vm311, %v312, 0.0
        %vm314 = vcmp.eq.s32.totalorder %v198, 1
        %v315 = vstv %s280
        %v316 = vsel %vm314, %v315, 0.0
        %v317 = vadd.f32 %v313, %v316
        %vm318 = vcmp.eq.s32.totalorder %v198, 2
        %v319 = vstv %s290
        %v320 = vsel %vm318, %v319, 0.0
        %v321 = vadd.f32 %v317, %v320
        %vm322 = vcmp.eq.s32.totalorder %v198, 3
        %v323 = vstv %s310
        %v324 = vsel %vm322, %v323, 0.0
        %v325 = vadd.f32 %v321, %v324
        %326 = vst [vmem:[%s194] sm:$0x1] %v325
        %s327 = sand.u32 %s82, 1
        %s328 = scalar_lea.sflag [#allocation4], %s327
        %s329 = sand.u32 %s82, 1
        %s330 = scalar_lea.vmem [#allocation7], %s329
        // Predicated region
        $region37: #{tpu_custom_call.1} parent=27 // pred_check
          %p331 = pneg %p92
        $region38: #{tpu_custom_call.1} parent=27 // pred_check_branch
          %333 = sbr.rel (%p331) target = $region40
        $region39: #{tpu_custom_call.1} parent=27 // pred_region
          %s335 = ssub.s32 16, 16
          %336 = vsyncadd %s328, %s335
          %s337 = smul.addr %s22, 16
          %s338 = scalar_lea.hbm %s2, %s337
          %s340 = sshll.u32 %s330, 4
          %s341 = int_to_ptr.vmem [resolvable:$true] %s340
          %343 = dma.vmem_to_hbm [thread:$0]  %s341, 16, %s338, %s328
        $region40: #{tpu_custom_call.1} parent=27 // pred_fallthru
          _
      $region28: #{tpu_custom_call.1} parent=5 // pred_fallthru
        _
      %p344 = scmp.le.s32.totalorder 2, %s17
      // Predicated region
      $region41: #{tpu_custom_call.1} parent=5 // pred_check
        %p345 = pneg %p344
      $region42: #{tpu_custom_call.1} parent=5 // pred_check_branch
        %347 = sbr.rel (%p345) target = $region44
      $region43: #{tpu_custom_call.1} parent=5 // pred_region
        %s348 = ssub.s32 %s17, 2
        // Predicated region
        $region45: #{tpu_custom_call.1} parent=43 // pred_check
          %p349 = pneg %p98
        $region46: #{tpu_custom_call.1} parent=43 // pred_check_branch
          %351 = sbr.rel (%p349) target = $region48
        $region47: #{tpu_custom_call.1} parent=43 // pred_region
          %s352 = sand.u32 %s83, 1
          %s353 = scalar_lea.sflag [#allocation4], %s352
          %s354 = sand.u32 %s83, 1
          %s355 = scalar_lea.vmem [#allocation7], %s354
          %356 = dma.done %s353, 16
        $region48: #{tpu_custom_call.1} parent=43 // pred_fallthru
          _
      $region44: #{tpu_custom_call.1} parent=5 // pred_fallthru
        _
    $region6: #{tpu_custom_call.1} parent=1 // loop_footer
      %s21 = sadd.s32 1, %s17
    $region7: #{tpu_custom_call.1} parent=1 // loop_footer_branch
      %16 = sbr.rel target = $region3
    $region8: #{tpu_custom_call.1} parent=1 // loop_exit
      _
    %357 = vsyncpa [#allocation3], 1
    %s358 = scalar_lea.sflag [#allocation3], 1
    %359 = vsyncpa %s358, 1
    %360 = vsyncpa [#allocation6], 1
    %s361 = scalar_lea.sflag [#allocation6], 1
    %362 = vsyncpa %s361, 1
    %363 = vsyncpa [#allocation4], 1
    %s364 = scalar_lea.sflag [#allocation4], 1
    %365 = vsyncpa %s364, 1

</llo_original>
